<compile_context>
chip_gen: v5e
topology: v5e:2x2
jax: 0.10.0
libtpu: 0.0.40
codegen_flags: <defaults>
</compile_context>

<pallas_src>
import numpy as np
import jax
import jax.numpy as jnp
from jax.experimental import pallas as pl
from jax.experimental.pallas import tpu as pltpu


# ---------------------------------------------------------------------------
# Kernels
# ---------------------------------------------------------------------------

def _copy_tile_kernel(x_ref, o_ref):
    # Dense 2D tile copy: no in-kernel reshape, no cross-lane movement.
    o_ref[...] = x_ref[...]


def _make_dma_copy_kernel(row_chunks):
    """Build an HBM->HBM copy kernel: start all chunk DMAs, then wait on all."""
    def kernel(x_hbm, o_hbm, sem):
        copies = []
        for i, (start, size) in enumerate(row_chunks):
            sl = pl.ds(start, size)
            cp = pltpu.make_async_copy(x_hbm.at[sl], o_hbm.at[sl], sem.at[i])
            cp.start()
            copies.append(cp)
        for cp in copies:
            cp.wait()
    return kernel


# ---------------------------------------------------------------------------
# Shape / tile selection helpers
# ---------------------------------------------------------------------------

_SUBLANE_ALIGN = {1: 32, 2: 16, 4: 8, 8: 8}


def _dense_2d_shape(lead, M):
    """Pick a lane/sublane-dense (rows, cols) factorization of lead*M.

    Flatten is a pure byte copy, so any 2D factorization of the flat buffer is
    valid.  Prefer cols = large multiple of 128 (lane-dense stores) with
    rows >= 8 (sublane-dense); fall back to the natural (lead, M) shape when no
    clean factorization exists (tiny or non-multiple-of-128 totals).
    """
    total = lead * M
    if total % 128 != 0 or total < 8 * 128:
        return lead, M
    cols = 128
    grew = True
    while grew:
        grew = False
        for p in (2, 3, 5, 7):
            nc = cols * p
            if total % nc == 0 and total // nc >= 8 and nc <= 32768:
                cols = nc
                grew = True
                break
    return total // cols, cols


def _pick_tiles(rows, cols, itemsize):
    """Itemsize-aware tile selection: ~8 MiB tiles, dtype-correct alignment."""
    sublane = _SUBLANE_ALIGN.get(itemsize, 8)
    target_tile_bytes = 8 * 1024 * 1024
    # ~16 KiB per tile row along the lane axis, always a multiple of 128.
    bn_pref = max(128, ((16384 // itemsize) // 128) * 128)
    bn = cols if cols <= bn_pref else bn_pref
    bm_pref = max(sublane, (target_tile_bytes // (bn * itemsize)) // sublane * sublane)
    bm = rows if rows <= bm_pref else bm_pref
    return bm, bn


# ---------------------------------------------------------------------------
# Copy paths
# ---------------------------------------------------------------------------

def _dma_copy_2d(x2d):
    """Direct HBM->HBM async-copy of a 2D slab (no VMEM round trip)."""
    rows, cols = int(x2d.shape[0]), int(x2d.shape[1])
    itemsize = jnp.dtype(x2d.dtype).itemsize
    total_bytes = rows * cols * itemsize

    # Up to 4 outstanding chunk DMAs for large buffers (hides issue latency);
    # a single DMA for small ones.
    n_chunks = 1
    for c in (4, 2):
        if rows % c == 0 and total_bytes >= c * (1 << 20):
            n_chunks = c
            break
    chunk_rows = rows // n_chunks
    row_chunks = [(i * chunk_rows, chunk_rows) for i in range(n_chunks)]

    cost = pl.CostEstimate(flops=0, transcendentals=0,
                           bytes_accessed=2 * total_bytes)

    return pl.pallas_call(
        _make_dma_copy_kernel(row_chunks),
        out_shape=jax.ShapeDtypeStruct((rows, cols), x2d.dtype),
        in_specs=[pl.BlockSpec(memory_space=pl.ANY)],
        out_specs=pl.BlockSpec(memory_space=pl.ANY),
        scratch_shapes=[pltpu.SemaphoreType.DMA((n_chunks,))],
        cost_estimate=cost,
    )(x2d)


def _tiled_copy_2d(x2d, donate=False):
    """HBM-roofline 2D copy via a BlockSpec-pipelined VMEM tile kernel."""
    rows, cols = int(x2d.shape[0]), int(x2d.shape[1])
    itemsize = jnp.dtype(x2d.dtype).itemsize
    bm, bn = _pick_tiles(rows, cols, itemsize)
    grid = (pl.cdiv(rows, bm), pl.cdiv(cols, bn))

    tile_bytes = bm * bn * itemsize
    # in + out, double-buffered = 4 x tile, plus headroom; keep under v7x's
    # 64 MiB physical VMEM and above v5e's 16 MiB scoped default.
    vmem_limit = int(min(48 * 1024 * 1024,
                         max(16 * 1024 * 1024, 4 * tile_bytes + (2 << 20))))

    cost = pl.CostEstimate(flops=0, transcendentals=0,
                           bytes_accessed=2 * rows * cols * itemsize)

    kwargs = {}
    if donate:
        # Caller-side donation drops the second HBM allocation (footprint win).
        kwargs["input_output_aliases"] = {0: 0}

    return pl.pallas_call(
        _copy_tile_kernel,
        out_shape=jax.ShapeDtypeStruct((rows, cols), x2d.dtype),
        grid=grid,
        in_specs=[pl.BlockSpec((bm, bn), lambda i, j: (i, j))],
        out_specs=pl.BlockSpec((bm, bn), lambda i, j: (i, j)),
        compiler_params=pltpu.CompilerParams(
            dimension_semantics=("parallel", "parallel"),
            vmem_limit_bytes=vmem_limit,
        ),
        cost_estimate=cost,
        **kwargs,
    )(x2d)


# ---------------------------------------------------------------------------
# Public wrapper (== Flatten(dim).forward)
# ---------------------------------------------------------------------------

def flatten_pallas(feat, dim=-1, force_copy=False, copy_method="dma", donate=False):
    """Pallas/JAX equivalent of torch.flatten(feat, start_dim=dim).

    Default path is a zero-copy metadata reshape.  Set force_copy=True to
    materialize the result through a Pallas copy kernel (copy_method is
    "dma" for a direct HBM->HBM async copy, or "tiled" for a BlockSpec
    pipelined VMEM tile copy).
    """
    shape = tuple(int(s) for s in feat.shape)
    ndim = len(shape)
    if ndim == 0:
        # torch.flatten on a scalar returns a 1-element 1-D tensor.
        return feat.reshape((1,))
    if not (-ndim <= dim < ndim):
        raise ValueError(
            f"flatten start_dim={dim} out of range for tensor with {ndim} dims")
    d = dim + ndim if dim < 0 else dim

    M = int(np.prod(shape[d:]))
    lead = int(np.prod(shape[:d])) if d > 0 else 1
    out_shape = shape[:d] + (M,)

    if (not force_copy) or lead * M == 0:
        # Zero-copy path: flatten of a contiguous array moves no data.
        return feat.reshape(out_shape)

    # Flatten is a pure byte copy, so we are free to pick a lane/sublane-dense
    # 2D factorization of the flat buffer for the copy kernel (free reshape).
    rows, cols = _dense_2d_shape(lead, M)
    x2d = feat.reshape((rows, cols))
    if copy_method == "dma":
        out2d = _dma_copy_2d(x2d)
    else:
        out2d = _tiled_copy_2d(x2d, donate=donate)
    return out2d.reshape(out_shape)


# ---------------------------------------------------------------------------
# Demo / self-test
# ---------------------------------------------------------------------------

if __name__ == "__main__":
    key = jax.random.PRNGKey(0)
    # Small conv-style NCHW input: batch=2, channels=4, spatial=16x16.
    x = jax.random.normal(key, (2, 4, 16, 16), dtype=jnp.float32)

    # Default module config: Flatten(dim=-1) -> shape no-op, zero-copy path.
    y_default = jax.block_until_ready(flatten_pallas(x, dim=-1))
    assert y_default.shape == (2, 4, 16, 16) and y_default.dtype == x.dtype
    np.testing.assert_array_equal(np.asarray(y_default), np.asarray(x))

    # Typical use: Flatten(dim=1) -> (N, C*H*W).
    ref_dim1 = np.asarray(x).reshape(2, -1)

    # 1) Zero-copy (recommended) path.
    y_fast = jax.block_until_ready(flatten_pallas(x, dim=1))
    assert y_fast.shape == (2, 4 * 16 * 16)
    np.testing.assert_array_equal(np.asarray(y_fast), ref_dim1)

    # 2) Materialized path: direct HBM->HBM DMA copy kernel.
    y_dma = jax.block_until_ready(flatten_pallas(x, dim=1, force_copy=True,
                                                 copy_method="dma"))
    assert y_dma.shape == (2, 1024) and y_dma.dtype == x.dtype
    np.testing.assert_array_equal(np.asarray(y_dma), ref_dim1)

    # 3) Materialized path: lane/sublane-dense tiled VMEM copy kernel.
    y_tiled = jax.block_until_ready(flatten_pallas(x, dim=1, force_copy=True,
                                                   copy_method="tiled"))
    np.testing.assert_array_equal(np.asarray(y_tiled), ref_dim1)

    # 4) dim=0 (lead=1) previously produced a 1-row slab; the dense
    #    re-factorization now gives rows >= 8.
    y_d0 = jax.block_until_ready(flatten_pallas(x, dim=0, force_copy=True,
                                                copy_method="tiled"))
    assert y_d0.shape == (2 * 4 * 16 * 16,)
    np.testing.assert_array_equal(np.asarray(y_d0), np.asarray(x).reshape(-1))

    # 5) Larger case exercising multi-chunk DMA and a multi-tile lane grid.
    x2 = jax.random.normal(jax.random.PRNGKey(1), (16, 8, 32, 32), jnp.float32)
    ref2 = np.asarray(x2).reshape(16, -1)
    y2_dma = jax.block_until_ready(flatten_pallas(x2, dim=1, force_copy=True,
                                                  copy_method="dma"))
    np.testing.assert_array_equal(np.asarray(y2_dma), ref2)
    y2_tiled = jax.block_until_ready(flatten_pallas(x2, dim=1, force_copy=True,
                                                    copy_method="tiled"))
    np.testing.assert_array_equal(np.asarray(y2_tiled), ref2)

    # 6) bf16 input exercising itemsize-aware tiling.
    xb = x.astype(jnp.bfloat16)
    yb = jax.block_until_ready(flatten_pallas(xb, dim=1, force_copy=True,
                                              copy_method="tiled"))
    assert yb.dtype == jnp.bfloat16
    np.testing.assert_array_equal(np.asarray(yb), np.asarray(xb).reshape(2, -1))

    # 7) Out-of-range dim raises (matches torch.flatten behavior).
    try:
        flatten_pallas(x, dim=7)
        raise AssertionError("expected ValueError for out-of-range dim")
    except ValueError:
        pass

    print("KERNEL_OK")
</pallas_src>

<mosaic_0001>
module attributes {stable_mosaic.version = 11 : i64} {
  func.func @kernel(%arg0: memref<8x256xf32, #tpu.memory_space<any>>, %arg1: memref<8x256xf32, #tpu.memory_space<any>>, %arg2: memref<1x!tpu.dma_semaphore, #tpu.memory_space<semaphore_mem>>) attributes {dimension_semantics = [], scalar_prefetch = 0 : i64, scratch_operands = 1 : i64, tpu.core_type = #tpu.core_type<tc>} {
    %c0_i32 = arith.constant 0 : i32
    %c0_i32_0 = arith.constant 0 : i32
    %c0_i32_1 = arith.constant 0 : i32
    %0 = tpu.memref_slice %arg0[%c0_i32_0, %c0_i32_1] : memref<8x256xf32, #tpu.memory_space<any>> -> memref<8x256xf32, #tpu.memory_space<any>>
    %c0_i32_2 = arith.constant 0 : i32
    %c0_i32_3 = arith.constant 0 : i32
    %1 = tpu.memref_slice %arg1[%c0_i32_2, %c0_i32_3] : memref<8x256xf32, #tpu.memory_space<any>> -> memref<8x256xf32, #tpu.memory_space<any>>
    %2 = tpu.memref_slice %arg2[%c0_i32] : memref<1x!tpu.dma_semaphore, #tpu.memory_space<semaphore_mem>> -> memref<1x!tpu.dma_semaphore, #tpu.memory_space<semaphore_mem>>
    %3 = tpu.memref_squeeze %2 : memref<1x!tpu.dma_semaphore, #tpu.memory_space<semaphore_mem>> -> memref<!tpu.dma_semaphore, #tpu.memory_space<semaphore_mem>>
    tpu.enqueue_dma source(%0 : memref<8x256xf32, #tpu.memory_space<any>>) target(%1 : memref<8x256xf32, #tpu.memory_space<any>>) target_semaphore(%3 : memref<!tpu.dma_semaphore, #tpu.memory_space<semaphore_mem>>)
    %c0_i32_4 = arith.constant 0 : i32
    %c0_i32_5 = arith.constant 0 : i32
    %c0_i32_6 = arith.constant 0 : i32
    %4 = tpu.memref_slice %arg0[%c0_i32_5, %c0_i32_6] : memref<8x256xf32, #tpu.memory_space<any>> -> memref<8x256xf32, #tpu.memory_space<any>>
    %c0_i32_7 = arith.constant 0 : i32
    %c0_i32_8 = arith.constant 0 : i32
    %5 = tpu.memref_slice %arg1[%c0_i32_7, %c0_i32_8] : memref<8x256xf32, #tpu.memory_space<any>> -> memref<8x256xf32, #tpu.memory_space<any>>
    %6 = tpu.memref_slice %arg2[%c0_i32_4] : memref<1x!tpu.dma_semaphore, #tpu.memory_space<semaphore_mem>> -> memref<1x!tpu.dma_semaphore, #tpu.memory_space<semaphore_mem>>
    %7 = tpu.memref_squeeze %6 : memref<1x!tpu.dma_semaphore, #tpu.memory_space<semaphore_mem>> -> memref<!tpu.dma_semaphore, #tpu.memory_space<semaphore_mem>>
    tpu.wait_dma2 semaphore(%7 : memref<!tpu.dma_semaphore, #tpu.memory_space<semaphore_mem>>) src(%4 : memref<8x256xf32, #tpu.memory_space<any>>) dst(%5 : memref<8x256xf32, #tpu.memory_space<any>>)
    return
  }
}

</mosaic_0001>

<llo_original>
// kernel: tpu_custom_call.1
$region0: #{tpu_custom_call.1}
  #allocation0 [shape = 'u32[]', space=smem, size = 0x4, offset = 0x4, fixed_abs, tag = 'smem constant byte address 0x4 - core index']
  #allocation1 [shape = 'u32[72,128]{1,0:T(1,128)}', space=vmem, size = 0x9000, scoped, tag = 'internal scratch']
  #allocation2 [shape = 's32[1]{0}', space=sflag, size = 0x4, scoped, tag = 'scratch operand']
  #allocation3 [shape = 's32[]', space=sflag, size = 0x4, offset = 0, fixed_abs, tag = 'sflag constant byte address 0x0 - dummy sync flag']
  #allocation4 [shape = 'u32[0]{0}', space=smem, size = 0, offset = 0, fixed_abs, tag = 'smem constant byte address 0x0 - null']
  %s0 = inlined_call_operand.hbm [shape: f32[8,256], index: 0, kind: input, shape index: {}]
  %s1 = inlined_call_operand.hbm [shape: f32[8,256], index: 1, kind: output, shape index: {}]
  %s2 = sld [smem:[#allocation0]]
  $region2: #{tpu_custom_call.1} parent=0
    _
  %s4 = ssub.s32 1, %s2
  %s5 = scalar_select 0, %s4, %s2
  %s7 = sshll.u32 1, 14
  %s8 = sxor.u32 4294967295, %s7
  %s10 = sshll.u32 %s0, 4
  %s11 = int_to_ptr.hbm [resolvable:$true] %s10
  %s12 = sshll.u32 %s1, 4
  %s13 = int_to_ptr.hbm [resolvable:$true] %s12
  %16 = dma.general %s11, 256, %s13, [#allocation2], [#allocation3], [#allocation4], 0, 0
  %s17 = smul.u32 8, 1
  %s18 = smul.u32 %s17, 2
  %s19 = sshll.u32 %s18, 4
  %20 = dma.done [#allocation2], %s19
  %21 = vsyncmov [#allocation2]
  %s22 = vpop.sfrf %21
  %p23 = scmp.eq.s32.totalorder %s22, 0
  %p24 = pneg %p23
  %26 = shalt.err (%p24)

</llo_original>
